<compile_context>
chip_gen: v5e
topology: v5e:2x2
jax: 0.10.0
libtpu: 0.0.40
codegen_flags: <defaults>
</compile_context>

<pallas_src>
import jax
import jax.numpy as jnp
from jax.experimental import pallas as pl
from jax.experimental.pallas import tpu as pltpu


def _round_up(n, m):
    return (n + m - 1) // m * m


def _linear_kernel(x_ref, w_ref, b_ref, o_ref):
    # x_ref: (TB, D) VMEM  -- streamed batch tile
    # w_ref: (1, D)  VMEM  -- weight row, resident across all batch tiles
    # b_ref: (1, 1)  SMEM  -- bias scalar
    # o_ref: (1, TB) VMEM  -- lane-dense output row for this tile
    prod = x_ref[...] * w_ref[...]          # VPU broadcast multiply (f32)
    y = jnp.sum(prod, axis=-1)              # (TB,) last-axis reduce (XLU)
    o_ref[...] = (y + b_ref[0, 0])[None, :].astype(o_ref.dtype)


def _choose_batch_tile(batch, feat, block_rows):
    """Pick the batch tile TB (sublane-aligned, VMEM-aware, lane-dense out)."""
    if batch <= block_rows:
        # Single tile: block == full (padded) array, any multiple of 8 works.
        return _round_up(batch, 8)
    # Multi-tile: TB must be a multiple of 128 so the (1, TB) output block is
    # an unmasked, lane-aligned store. Keep the double-buffered x stream
    # (2 * TB * feat * 4B) under ~16 MiB so it fits on every TPU generation.
    budget = 16 * 1024 * 1024
    max_rows = budget // (2 * feat * 4)
    tb = min(block_rows, max(128, (max_rows // 128) * 128))
    # TODO(synk): for very large input_size (D >~ 16K) also tile the reduction
    # axis (grid=(cdiv(B,TB), cdiv(D,TK)), f32 VMEM accumulator, reduction axis
    # last + "arbitrary") so per-block VMEM stays bounded on v7x's 64 MiB VMEM.
    return tb


def linear_regression_forward(x, weight, bias, *, block_rows=512):
    """Forward pass of nn.Linear(input_size, 1): y = x @ weight.T + bias.

    Args:
      x:      (batch, input_size) float32
      weight: (1, input_size) float32  (PyTorch layout)
      bias:   (1,) float32
    Returns:
      (batch, 1) float32
    """
    batch, feat = x.shape
    assert weight.shape == (1, feat)

    tb = _choose_batch_tile(batch, feat, block_rows)
    grid = pl.cdiv(batch, tb)
    b_padded = grid * tb
    if b_padded != batch:
        x = jnp.pad(x, ((0, b_padded - batch), (0, 0)))

    b_smem = bias.reshape(1, 1).astype(jnp.float32)

    out_row = pl.pallas_call(
        _linear_kernel,
        out_shape=jax.ShapeDtypeStruct((1, b_padded), x.dtype),
        grid_spec=pl.GridSpec(
            grid=(grid,),
            in_specs=[
                # Streamed batch tile of x (auto double-buffered pipeline).
                pl.BlockSpec((tb, feat), lambda i: (i, 0)),
                # Weight row: constant block index -> stays VMEM-resident.
                pl.BlockSpec((1, feat), lambda i: (0, 0)),
                # Bias scalar lives in SMEM (no VMEM tile / DMA bookkeeping).
                pl.BlockSpec(memory_space=pltpu.MemorySpace.SMEM),
            ],
            # Lane-dense output: batch on the lane axis -> unmasked stores.
            out_specs=pl.BlockSpec((1, tb), lambda i: (0, i)),
        ),
        compiler_params=pltpu.CompilerParams(
            # Lets v7x's two TensorCores shard the batch grid; neutral on
            # single-TC v5e/v6e.
            dimension_semantics=("parallel",),
            # Headroom for roofline-sized tiles; safe on v5e/v6e/v7x.
            vmem_limit_bytes=32 * 1024 * 1024,
        ),
    )(x, weight, b_smem)

    return out_row.reshape(b_padded, 1)[:batch]


if __name__ == "__main__":
    key = jax.random.PRNGKey(0)
    kx, kw, kb = jax.random.split(key, 3)

    batch, input_size = 8, 32
    x = jax.random.normal(kx, (batch, input_size), dtype=jnp.float32)
    # Deterministic parameter init (mimics nn.Linear's uniform(-1/sqrt(D), 1/sqrt(D)))
    bound = 1.0 / (input_size ** 0.5)
    weight = jax.random.uniform(kw, (1, input_size), jnp.float32, -bound, bound)
    bias = jax.random.uniform(kb, (1,), jnp.float32, -bound, bound)

    y = linear_regression_forward(x, weight, bias)
    y = jax.block_until_ready(y)

    y_ref = x @ weight.T + bias
    assert y.shape == (batch, 1)
    assert jnp.allclose(y, y_ref, atol=1e-5, rtol=1e-5)

    # Also exercise the multi-tile + padded-batch path (grid > 1, B not a tile
    # multiple) at a still-small size by forcing a 128-row tile.
    batch2 = 300
    x2 = jax.random.normal(kx, (batch2, input_size), dtype=jnp.float32)
    y2 = jax.block_until_ready(
        linear_regression_forward(x2, weight, bias, block_rows=128))
    y2_ref = x2 @ weight.T + bias
    assert y2.shape == (batch2, 1)
    assert jnp.allclose(y2, y2_ref, atol=1e-5, rtol=1e-5)

    print("KERNEL_OK")
</pallas_src>

<mosaic_0001>
module attributes {stable_mosaic.version = 11 : i64} {
  func.func @_linear_kernel(%arg0: i32, %arg1: memref<8x32xf32, #tpu.memory_space<vmem>>, %arg2: memref<1x32xf32, #tpu.memory_space<vmem>>, %arg3: memref<1x1xf32, #tpu.memory_space<smem>>, %arg4: memref<1x8xf32, #tpu.memory_space<vmem>>) attributes {dimension_semantics = [#tpu.dimension_semantics<parallel>], iteration_bounds = array<i64: 1>, scalar_prefetch = 0 : i64, scratch_operands = 0 : i64, tpu.core_type = #tpu.core_type<tc>, window_params = [{transform_indices = @transform_0, window_bounds = array<i64: 8, 32>}, {pipeline_mode = #tpu.pipeline_mode<synchronous>, transform_indices = @transform_1, window_bounds = array<i64: 1, 32>}, {transform_indices = @transform_2, window_bounds = array<i64: 1, 1>}, {transform_indices = @transform_3, window_bounds = array<i64: 1, 8>}]} {
    %c0 = arith.constant 0 : index
    %c0_0 = arith.constant 0 : index
    %0 = vector.load %arg1[%c0, %c0_0] : memref<8x32xf32, #tpu.memory_space<vmem>>, vector<8x32xf32>
    %c0_1 = arith.constant 0 : index
    %c0_2 = arith.constant 0 : index
    %1 = vector.load %arg2[%c0_1, %c0_2] : memref<1x32xf32, #tpu.memory_space<vmem>>, vector<1x32xf32>
    %2 = vector.broadcast %1 : vector<1x32xf32> to vector<8x32xf32>
    %3 = arith.mulf %0, %2 : vector<8x32xf32>
    %cst = arith.constant dense<0.000000e+00> : vector<8xf32>
    %4 = vector.multi_reduction <add>, %3, %cst [1] : vector<8x32xf32> to vector<8xf32>
    %c0_3 = arith.constant 0 : index
    %c0_4 = arith.constant 0 : index
    %5 = memref.load %arg3[%c0_3, %c0_4] : memref<1x1xf32, #tpu.memory_space<smem>>
    %6 = vector.broadcast %5 : f32 to vector<8xf32>
    %7 = arith.addf %4, %6 : vector<8xf32>
    %8 = vector.shape_cast %7 : vector<8xf32> to vector<1x8xf32>
    %c0_5 = arith.constant 0 : index
    %c0_6 = arith.constant 0 : index
    %9 = vector.load %arg4[%c0_5, %c0_6] : memref<1x8xf32, #tpu.memory_space<vmem>>, vector<1x8xf32>
    tpu.vector_store %arg4[%c0_5, %c0_6], %8 {strides = array<i32>} : memref<1x8xf32, #tpu.memory_space<vmem>>, vector<1x8xf32>,
    return
  }
  func.func @transform_0(%arg0: i32) -> (i32, i32) {
    %c0_i32 = arith.constant 0 : i32
    %c0_i32_0 = arith.constant 0 : i32
    return %arg0, %c0_i32 : i32, i32
  }
  func.func @transform_1(%arg0: i32) -> (i32, i32) {
    %c0_i32 = arith.constant 0 : i32
    %c0_i32_0 = arith.constant 0 : i32
    %c0_i32_1 = arith.constant 0 : i32
    return %c0_i32, %c0_i32_0 : i32, i32
  }
  func.func @transform_2(%arg0: i32) -> (i32, i32) {
    %c0_i32 = arith.constant 0 : i32
    %c0_i32_0 = arith.constant 0 : i32
    %c0_i32_1 = arith.constant 0 : i32
    return %c0_i32, %c0_i32_0 : i32, i32
  }
  func.func @transform_3(%arg0: i32) -> (i32, i32) {
    %c0_i32 = arith.constant 0 : i32
    %c0_i32_0 = arith.constant 0 : i32
    return %c0_i32, %arg0 : i32, i32
  }
}

</mosaic_0001>

<llo_original>
// kernel: tpu_custom_call.1
$region0: #{tpu_custom_call.1}
  #allocation0 [shape = 'u32[]', space=smem, size = 0x4, offset = 0x4, fixed_abs, tag = 'smem constant byte address 0x4 - core index']
  #allocation1 [shape = 'u32[72,128]{1,0:T(1,128)}', space=vmem, size = 0x9000, scoped, tag = 'internal scratch']
  #allocation2 [shape = 'f32[1,1]{1,0:T(1,128)S(6)}', space=smem, size = 0x200, scoped, tag = 'scoped memory for tpu_custom_call.1']
  %s0 = inlined_call_operand.hbm [shape: f32[8,32], index: 0, kind: input, shape index: {}]
  %s1 = inlined_call_operand.vmem [shape: f32[1,32], index: 1, kind: input, shape index: {}]
  %s2 = inlined_call_operand.<no memory space> [shape: f32[1,1], index: 2, kind: input, shape index: {}]
  %s3 = inlined_call_operand.hbm [shape: f32[1,8], index: 3, kind: output, shape index: {}]
  %s4 = sld [smem:[#allocation0]]
  $region26: #{tpu_custom_call.1} parent=0
    _
  %s6 = ssub.s32 1, %s4
  %s7 = scalar_select 0, %s6, %s4
  %8 = sst [smem:[#allocation2]] %s2
  $region1: #{tpu_custom_call.1} parent=0
    #allocation3 [shape = 'u8[4096]{0}', space=vmem, size = 0x1000, scoped, tag = 'input window, operand 0, single buffered']
    #allocation4 [shape = 's32[1]{0}', space=sflag, size = 0x4, scoped, tag = 'scoped memory for tpu_custom_call.1']
    #allocation5 [shape = 's32[1]{0}', space=sflag, size = 0x4, scoped, tag = 'scoped memory for tpu_custom_call.1']
    #allocation6 [shape = 'u8[512]{0}', space=vmem, size = 0x400, scoped, tag = 'output window, operand 0, single buffered']
    %9 = vsyncpa [#allocation4], 0
    %10 = vsyncpa [#allocation5], 0
    // Predicated region
    $region2: #{tpu_custom_call.1} parent=1 // pred_check
      _
    $region3: #{tpu_custom_call.1} parent=1 // pred_check_branch
      %12 = sbr.rel (0) target = $region5
    $region4: #{tpu_custom_call.1} parent=1 // pred_region
      %14 = vsyncadd [#allocation4], 0
      %s16 = sshll.u32 %s0, 4
      %s17 = int_to_ptr.hbm [resolvable:$true] %s16
      %s18 = sshll.u32 [#allocation3], 4
      %s19 = int_to_ptr.vmem [resolvable:$true] %s18
      %21 = dma.hbm_to_vmem [thread:$0]  %s17, 128, %s19, [#allocation4]
    $region5: #{tpu_custom_call.1} parent=1 // pred_fallthru
      _
    // Predicated region
    $region6: #{tpu_custom_call.1} parent=1 // pred_check
      _
    $region7: #{tpu_custom_call.1} parent=1 // pred_check_branch
      %23 = sbr.rel (0) target = $region9
    $region8: #{tpu_custom_call.1} parent=1 // pred_region
      _
    $region9: #{tpu_custom_call.1} parent=1 // pred_fallthru
      _
    // Predicated region
    $region10: #{tpu_custom_call.1} parent=1 // pred_check
      _
    $region11: #{tpu_custom_call.1} parent=1 // pred_check_branch
      %25 = sbr.rel (0) target = $region13
    $region12: #{tpu_custom_call.1} parent=1 // pred_region
      _
    $region13: #{tpu_custom_call.1} parent=1 // pred_fallthru
      _
    // Predicated region
    $region14: #{tpu_custom_call.1} parent=1 // pred_check
      _
    $region15: #{tpu_custom_call.1} parent=1 // pred_check_branch
      %27 = sbr.rel (0) target = $region17
    $region16: #{tpu_custom_call.1} parent=1 // pred_region
      %29 = dma.done [#allocation4], 128
    $region17: #{tpu_custom_call.1} parent=1 // pred_fallthru
      _
    %v30 = vld [vmem:[#allocation3] sm:$0xff]
    %v31 = vld [vmem:[%s1] sm:$0x1]
    %v33 = vperm.slane %v31, 0
    %v35 = vmul.f32 %v30, %v33
    %vm36 = vcmask 261120
    %v37 = vsel %vm36, %v35, 0.0
    %38 = vadd.xlane.f32.xlu0 %v37
    %v39 = vpop.xlane.xlu0 %38
    %s40 = sld [smem:[#allocation2]]
    %v41 = vstv %s40
    %v42 = vadd.f32 %v39, %v41
    %v44 = vlaneseq
    %v45 = vand.u32 %v44, 127
    %v46 = vperm.slane %v42, %v45
    %vm48 = vcmask 57344
    %49 = vst.msk [vmem:[#allocation6] sm:$0x1] %vm48, %v46
    // Predicated region
    $region18: #{tpu_custom_call.1} parent=1 // pred_check
      _
    $region19: #{tpu_custom_call.1} parent=1 // pred_check_branch
      %51 = sbr.rel (0) target = $region21
    $region20: #{tpu_custom_call.1} parent=1 // pred_region
      %53 = vsyncadd [#allocation5], 0
      %s55 = sshll.u32 [#allocation6], 4
      %s56 = int_to_ptr.vmem [resolvable:$true] %s55
      %s57 = sshll.u32 %s3, 4
      %s58 = int_to_ptr.hbm [resolvable:$true] %s57
      %60 = dma.vmem_to_hbm [thread:$0]  %s56, 16, %s58, [#allocation5]
    $region21: #{tpu_custom_call.1} parent=1 // pred_fallthru
      _
    // Predicated region
    $region22: #{tpu_custom_call.1} parent=1 // pred_check
      _
    $region23: #{tpu_custom_call.1} parent=1 // pred_check_branch
      %62 = sbr.rel (0) target = $region25
    $region24: #{tpu_custom_call.1} parent=1 // pred_region
      %64 = dma.done [#allocation5], 16
    $region25: #{tpu_custom_call.1} parent=1 // pred_fallthru
      _
    %65 = vsyncpa [#allocation4], 1
    %66 = vsyncpa [#allocation5], 1

</llo_original>
